<compile_context>
chip_gen: v6e
topology: v6e:2x2x1
jax: 0.10.0
libtpu: 0.0.40
codegen_flags: <defaults>
</compile_context>

<pallas_src>
import functools

import jax
import jax.numpy as jnp
from jax.experimental import pallas as pl
from jax.experimental.pallas import tpu as pltpu

LANES = 128
MAX_BLOCK_ROWS = 2048  # (2048, 128) f32 block = 1 MiB; 2 in x 2 bufs = 4 MiB


def _round_up(x: int, m: int) -> int:
    return ((x + m - 1) // m) * m


def _focal_loss_kernel(x_ref, t_ref, out_ref, acc_ref, *,
                       focal: bool, alpha: float, gamma: float,
                       n_valid: int, block_rows: int):
    i = pl.program_id(0)

    @pl.when(i == 0)
    def _():
        acc_ref[...] = jnp.zeros_like(acc_ref)

    x = x_ref[...].astype(jnp.float32)
    t = t_ref[...].astype(jnp.float32)

    # F.binary_cross_entropy clamps the log terms at -100 (PyTorch semantics).
    log_x = jnp.maximum(jnp.log(x), -100.0)
    log_1mx = jnp.maximum(jnp.log(1.0 - x), -100.0)
    bce = -(t * log_x + (1.0 - t) * log_1mx)

    if focal:
        p_t = x * t + (1.0 - x) * (1.0 - t)
        one_minus_pt = 1.0 - p_t
        g = float(gamma)
        if g == 0.0:
            loss = bce
        elif g.is_integer() and 0 < g <= 8:
            # Compile-time integer gamma: repeated multiplies, no EUP pow.
            mod = one_minus_pt
            for _ in range(int(g) - 1):
                mod = mod * one_minus_pt
            loss = bce * mod
        else:
            loss = bce * one_minus_pt ** g
        if alpha >= 0:
            alpha_t = alpha * t + (1.0 - alpha) * (1.0 - t)
            loss = alpha_t * loss
    else:
        loss = bce

    # Mask lane padding / last-block overrun (garbage reads) via global index.
    row_ids = jax.lax.broadcasted_iota(jnp.int32, loss.shape, 0)
    lane_ids = jax.lax.broadcasted_iota(jnp.int32, loss.shape, 1)
    global_idx = (i * block_rows + row_ids) * LANES + lane_ids
    loss = jnp.where(global_idx < n_valid, loss, 0.0)

    # Sublane reduce per step (cheap); keep per-lane partial sums in VMEM.
    acc_ref[...] += jnp.sum(loss, axis=0, keepdims=True)

    @pl.when(i == pl.num_programs(0) - 1)
    def _():
        out_ref[0, 0] = jnp.sum(acc_ref[...]) / jnp.float32(n_valid)


@functools.partial(jax.jit, static_argnames=("focal", "alpha", "gamma"))
def _focal_bce_mean(inputs, targets, *, focal: bool, alpha: float, gamma: float):
    x = jnp.asarray(inputs, jnp.float32).reshape(-1)
    t = jnp.asarray(targets, jnp.float32).reshape(-1)
    n = x.shape[0]

    # Pad only to a multiple of 128 (reshape requirement); tail is masked
    # in-kernel, so pad values are irrelevant.
    pad = (-n) % LANES
    if pad:
        x = jnp.pad(x, (0, pad))
        t = jnp.pad(t, (0, pad))

    rows = x.shape[0] // LANES
    x2 = x.reshape(rows, LANES)
    t2 = t.reshape(rows, LANES)

    block_rows = min(MAX_BLOCK_ROWS, _round_up(rows, 8))
    num_blocks = pl.cdiv(rows, block_rows)

    kernel = functools.partial(
        _focal_loss_kernel,
        focal=bool(focal),
        alpha=float(alpha),
        gamma=float(gamma),
        n_valid=n,
        block_rows=block_rows,
    )

    # Advisory cost estimate (helps XLA schedule the call in a larger jit).
    trans_per_elem = 2  # two clamped logs
    if focal:
        g = float(gamma)
        if not (g == 0.0 or (g.is_integer() and 0 < g <= 8)):
            trans_per_elem += 2  # pow -> exp(g*log(.)) fallback
    cost = pl.CostEstimate(
        flops=16 * n,
        transcendentals=trans_per_elem * n,
        bytes_accessed=2 * 4 * rows * LANES + 4,
    )

    loss = pl.pallas_call(
        kernel,
        out_shape=jax.ShapeDtypeStruct((1, 1), jnp.float32),
        grid_spec=pltpu.PrefetchScalarGridSpec(
            num_scalar_prefetch=0,
            grid=(num_blocks,),
            in_specs=[
                pl.BlockSpec((block_rows, LANES), lambda i: (i, 0)),
                pl.BlockSpec((block_rows, LANES), lambda i: (i, 0)),
            ],
            out_specs=pl.BlockSpec(memory_space=pltpu.MemorySpace.SMEM),
            scratch_shapes=[pltpu.VMEM((1, LANES), jnp.float32)],
        ),
        compiler_params=pltpu.CompilerParams(
            dimension_semantics=("arbitrary",)),
        cost_estimate=cost,
    )(x2, t2)

    return loss[0, 0]


class Criterion:
    """JAX/Pallas port of Tau3MuGNNs Criterion.forward."""

    def __init__(self, optimizer_config):
        self.focal_loss = bool(optimizer_config['focal_loss'])
        self.alpha = float(optimizer_config['focal_alpha'])
        self.gamma = float(optimizer_config['focal_gamma'])

    def forward(self, inputs, targets):
        loss = _focal_bce_mean(inputs, targets,
                               focal=self.focal_loss,
                               alpha=self.alpha,
                               gamma=self.gamma)
        # Single device->host sync (original module calls .item() twice).
        loss_val = float(loss)
        key = 'focal' if self.focal_loss else 'bce'
        loss_dict = {key: loss_val, 'total': loss_val}
        return loss, loss_dict

    __call__ = forward


def _reference_loss(inputs, targets, focal, alpha, gamma):
    x = jnp.asarray(inputs, jnp.float32)
    t = jnp.asarray(targets, jnp.float32)
    bce = -(t * jnp.maximum(jnp.log(x), -100.0)
            + (1.0 - t) * jnp.maximum(jnp.log(1.0 - x), -100.0))
    if focal:
        p_t = x * t + (1.0 - x) * (1.0 - t)
        loss = bce * (1.0 - p_t) ** gamma
        if alpha >= 0:
            alpha_t = alpha * t + (1.0 - alpha) * (1.0 - t)
            loss = alpha_t * loss
    else:
        loss = bce
    return jnp.mean(loss)


if __name__ == "__main__":
    key = jax.random.PRNGKey(0)
    k1, k2 = jax.random.split(key)

    # Binary-classification probabilities and 0/1 labels, shape (N, 1).
    N = 2000
    logits = jax.random.normal(k1, (N, 1), jnp.float32)
    inputs = jax.nn.sigmoid(logits)                      # probabilities in (0,1)
    targets = (jax.random.uniform(k2, (N, 1)) > 0.5).astype(jnp.float32)

    # Focal branch (gamma=2 -> multiplies, no pow).
    config = {'focal_loss': True, 'focal_alpha': 0.25, 'focal_gamma': 2.0}
    criterion = Criterion(config)
    loss, loss_dict = criterion(inputs, targets)
    loss = jax.block_until_ready(loss)
    ref = _reference_loss(inputs, targets, True, 0.25, 2.0)
    assert abs(float(loss) - float(ref)) < 1e-5, (float(loss), float(ref))
    assert abs(loss_dict['focal'] - float(ref)) < 1e-5
    assert abs(loss_dict['total'] - float(ref)) < 1e-5

    # Plain-BCE branch.
    criterion_bce = Criterion({'focal_loss': False, 'focal_alpha': -1.0,
                               'focal_gamma': 0.0})
    loss_bce, _ = criterion_bce(inputs, targets)
    loss_bce = jax.block_until_ready(loss_bce)
    ref_bce = _reference_loss(inputs, targets, False, -1.0, 0.0)
    assert abs(float(loss_bce) - float(ref_bce)) < 1e-5

    # Non-multiple-of-128 / non-integer-gamma path (pow fallback + tail mask).
    M = 777
    x_small = jax.nn.sigmoid(jax.random.normal(k1, (M, 1), jnp.float32))
    t_small = (jax.random.uniform(k2, (M, 1)) > 0.5).astype(jnp.float32)
    crit_frac = Criterion({'focal_loss': True, 'focal_alpha': 0.25,
                           'focal_gamma': 1.5})
    loss_frac, _ = crit_frac(x_small, t_small)
    loss_frac = jax.block_until_ready(loss_frac)
    ref_frac = _reference_loss(x_small, t_small, True, 0.25, 1.5)
    assert abs(float(loss_frac) - float(ref_frac)) < 1e-5

    print("KERNEL_OK")
</pallas_src>

<mosaic_0001>
module attributes {stable_mosaic.version = 11 : i64} {
  func.func @_focal_loss_kernel(%arg0: i32, %arg1: memref<16x128xf32, #tpu.memory_space<vmem>>, %arg2: memref<16x128xf32, #tpu.memory_space<vmem>>, %arg3: memref<1x1xf32, #tpu.memory_space<smem>>, %arg4: memref<1x128xf32, #tpu.memory_space<vmem>>) attributes {dimension_semantics = [#tpu.dimension_semantics<arbitrary>], iteration_bounds = array<i64: 1>, scalar_prefetch = 0 : i64, scratch_operands = 1 : i64, tpu.core_type = #tpu.core_type<tc>, window_params = [{transform_indices = @transform_0, window_bounds = array<i64: 16, 128>}, {transform_indices = @transform_1, window_bounds = array<i64: 16, 128>}, {transform_indices = @transform_2, window_bounds = array<i64: 1, 1>}]} {
    %c0_i32 = arith.constant 0 : i32
    %0 = arith.cmpi eq, %arg0, %c0_i32 : i32
    %1 = arith.extui %0 : i1 to i32
    %c0_i32_0 = arith.constant 0 : i32
    %2 = arith.cmpi ne, %1, %c0_i32_0 : i32
    scf.if %2 {
      %cst_22 = arith.constant 0.000000e+00 : f32
      %59 = vector.broadcast %cst_22 : f32 to vector<1x128xf32>
      %c0_23 = arith.constant 0 : index
      %c0_24 = arith.constant 0 : index
      %60 = vector.load %arg4[%c0_23, %c0_24] : memref<1x128xf32, #tpu.memory_space<vmem>>, vector<1x128xf32>
      tpu.vector_store %arg4[%c0_23, %c0_24], %59 {strides = array<i32>} : memref<1x128xf32, #tpu.memory_space<vmem>>, vector<1x128xf32>,
    } else {
    }
    %c0 = arith.constant 0 : index
    %c0_1 = arith.constant 0 : index
    %3 = vector.load %arg1[%c0, %c0_1] : memref<16x128xf32, #tpu.memory_space<vmem>>, vector<16x128xf32>
    %c0_2 = arith.constant 0 : index
    %c0_3 = arith.constant 0 : index
    %4 = vector.load %arg2[%c0_2, %c0_3] : memref<16x128xf32, #tpu.memory_space<vmem>>, vector<16x128xf32>
    %5 = math.log %3 : vector<16x128xf32>
    %cst = arith.constant -1.000000e+02 : f32
    %6 = vector.broadcast %cst : f32 to vector<16x128xf32>
    %7 = arith.maximumf %5, %6 : vector<16x128xf32>
    %cst_4 = arith.constant 1.000000e+00 : f32
    %8 = vector.broadcast %cst_4 : f32 to vector<16x128xf32>
    %9 = arith.subf %8, %3 : vector<16x128xf32>
    %10 = math.log %9 : vector<16x128xf32>
    %cst_5 = arith.constant -1.000000e+02 : f32
    %11 = vector.broadcast %cst_5 : f32 to vector<16x128xf32>
    %12 = arith.maximumf %10, %11 : vector<16x128xf32>
    %13 = arith.mulf %4, %7 : vector<16x128xf32>
    %cst_6 = arith.constant 1.000000e+00 : f32
    %14 = vector.broadcast %cst_6 : f32 to vector<16x128xf32>
    %15 = arith.subf %14, %4 : vector<16x128xf32>
    %16 = arith.mulf %15, %12 : vector<16x128xf32>
    %17 = arith.addf %13, %16 : vector<16x128xf32>
    %cst_7 = arith.constant 0.000000e+00 : f32
    %18 = vector.broadcast %cst_7 : f32 to vector<16x128xf32>
    %19 = arith.subf %18, %17 : vector<16x128xf32>
    %20 = arith.mulf %3, %4 : vector<16x128xf32>
    %cst_8 = arith.constant 1.000000e+00 : f32
    %21 = vector.broadcast %cst_8 : f32 to vector<16x128xf32>
    %22 = arith.subf %21, %3 : vector<16x128xf32>
    %cst_9 = arith.constant 1.000000e+00 : f32
    %23 = vector.broadcast %cst_9 : f32 to vector<16x128xf32>
    %24 = arith.subf %23, %4 : vector<16x128xf32>
    %25 = arith.mulf %22, %24 : vector<16x128xf32>
    %26 = arith.addf %20, %25 : vector<16x128xf32>
    %cst_10 = arith.constant 1.000000e+00 : f32
    %27 = vector.broadcast %cst_10 : f32 to vector<16x128xf32>
    %28 = arith.subf %27, %26 : vector<16x128xf32>
    %29 = arith.mulf %28, %28 : vector<16x128xf32>
    %30 = arith.mulf %19, %29 : vector<16x128xf32>
    %cst_11 = arith.constant 2.500000e-01 : f32
    %31 = vector.broadcast %cst_11 : f32 to vector<16x128xf32>
    %32 = arith.mulf %31, %4 : vector<16x128xf32>
    %cst_12 = arith.constant 1.000000e+00 : f32
    %33 = vector.broadcast %cst_12 : f32 to vector<16x128xf32>
    %34 = arith.subf %33, %4 : vector<16x128xf32>
    %cst_13 = arith.constant 7.500000e-01 : f32
    %35 = vector.broadcast %cst_13 : f32 to vector<16x128xf32>
    %36 = arith.mulf %35, %34 : vector<16x128xf32>
    %37 = arith.addf %32, %36 : vector<16x128xf32>
    %38 = arith.mulf %37, %30 : vector<16x128xf32>
    %39 = tpu.iota {dimensions = array<i32: 0>} : vector<16x128xi32>
    %40 = tpu.iota {dimensions = array<i32: 1>} : vector<16x128xi32>
    %c16_i32 = arith.constant 16 : i32
    %41 = arith.muli %arg0, %c16_i32 : i32
    %42 = vector.broadcast %41 : i32 to vector<16x128xi32>
    %43 = arith.addi %42, %39 : vector<16x128xi32>
    %c128_i32 = arith.constant 128 : i32
    %44 = vector.broadcast %c128_i32 : i32 to vector<16x128xi32>
    %45 = arith.muli %43, %44 : vector<16x128xi32>
    %46 = arith.addi %45, %40 : vector<16x128xi32>
    %c2000_i32 = arith.constant 2000 : i32
    %47 = vector.broadcast %c2000_i32 : i32 to vector<16x128xi32>
    %48 = arith.cmpi slt, %46, %47 : vector<16x128xi32>
    %cst_14 = arith.constant 0.000000e+00 : f32
    %49 = vector.broadcast %cst_14 : f32 to vector<16x128xf32>
    %50 = arith.select %48, %38, %49 : vector<16x128xi1>, vector<16x128xf32>
    %c0_15 = arith.constant 0 : index
    %c0_16 = arith.constant 0 : index
    %51 = vector.load %arg4[%c0_15, %c0_16] : memref<1x128xf32, #tpu.memory_space<vmem>>, vector<1x128xf32>
    %cst_17 = arith.constant dense<0.000000e+00> : vector<128xf32>
    %52 = vector.multi_reduction <add>, %50, %cst_17 [0] : vector<16x128xf32> to vector<128xf32>
    %53 = vector.shape_cast %52 : vector<128xf32> to vector<1x128xf32>
    %54 = arith.addf %51, %53 : vector<1x128xf32>
    %c0_18 = arith.constant 0 : index
    %c0_19 = arith.constant 0 : index
    %55 = vector.load %arg4[%c0_18, %c0_19] : memref<1x128xf32, #tpu.memory_space<vmem>>, vector<1x128xf32>
    tpu.vector_store %arg4[%c0_18, %c0_19], %54 {strides = array<i32>} : memref<1x128xf32, #tpu.memory_space<vmem>>, vector<1x128xf32>,
    %c0_i32_20 = arith.constant 0 : i32
    %56 = arith.cmpi eq, %arg0, %c0_i32_20 : i32
    %57 = arith.extui %56 : i1 to i32
    %c0_i32_21 = arith.constant 0 : i32
    %58 = arith.cmpi ne, %57, %c0_i32_21 : i32
    scf.if %58 {
      %c0_22 = arith.constant 0 : index
      %c0_23 = arith.constant 0 : index
      %59 = vector.load %arg4[%c0_22, %c0_23] : memref<1x128xf32, #tpu.memory_space<vmem>>, vector<1x128xf32>
      %60 = vector.shape_cast %59 : vector<1x128xf32> to vector<1x1x128xf32>
      %cst_24 = arith.constant dense<0.000000e+00> : vector<1xf32>
      %61 = vector.multi_reduction <add>, %60, %cst_24 [1, 2] : vector<1x1x128xf32> to vector<1xf32>
      %62 = vector.shape_cast %61 : vector<1xf32> to vector<1x1x1xf32>
      %63 = vector.extract %62[0, 0, 0] : f32 from vector<1x1x1xf32>
      %cst_25 = arith.constant 2.000000e+03 : f32
      %64 = arith.divf %63, %cst_25 : f32
      %c0_26 = arith.constant 0 : index
      %c0_27 = arith.constant 0 : index
      %65 = memref.load %arg3[%c0_26, %c0_27] : memref<1x1xf32, #tpu.memory_space<smem>>
      memref.store %64, %arg3[%c0_26, %c0_27] : memref<1x1xf32, #tpu.memory_space<smem>>
    } else {
    }
    return
  }
  func.func @transform_0(%arg0: i32) -> (i32, i32) {
    %c0_i32 = arith.constant 0 : i32
    %c0_i32_0 = arith.constant 0 : i32
    return %arg0, %c0_i32 : i32, i32
  }
  func.func @transform_1(%arg0: i32) -> (i32, i32) {
    %c0_i32 = arith.constant 0 : i32
    %c0_i32_0 = arith.constant 0 : i32
    return %arg0, %c0_i32 : i32, i32
  }
  func.func @transform_2(%arg0: i32) -> (i32, i32) {
    %c0_i32 = arith.constant 0 : i32
    %c0_i32_0 = arith.constant 0 : i32
    %c0_i32_1 = arith.constant 0 : i32
    return %c0_i32, %c0_i32_0 : i32, i32
  }
}

</mosaic_0001>

<llo_original>
// kernel: _focal_bce_mean.1
$region0: #{_focal_bce_mean.1}
  #allocation0 [shape = 'u32[]', space=smem, size = 0x4, offset = 0x4, fixed_abs, tag = 'smem constant byte address 0x4 - core index']
  #allocation1 [shape = 'u32[144,128]{1,0:T(1,128)}', space=vmem, size = 0x12000, scoped, tag = 'internal scratch']
  #allocation2 [shape = 'f32[1,128]{1,0:T(1,128)}', space=vmem, size = 0x200, scoped, tag = 'scratch operand']
  %s0 = inlined_call_operand.vmem [shape: f32[16,128], index: 0, kind: input, shape index: {}]
  %s1 = inlined_call_operand.vmem [shape: f32[16,128], index: 1, kind: input, shape index: {}]
  %s2 = inlined_call_operand.hbm [shape: f32[1,1], index: 2, kind: output, shape index: {}]
  %s3 = sld [smem:[#allocation0]]
  $region26: #{_focal_bce_mean.1} parent=0
    _
  %s5 = ssub.s32 1, %s3
  %s6 = scalar_select 0, %s5, %s3
  $region1: #{_focal_bce_mean.1} parent=0
    #allocation3 [shape = 'u8[512]{0}', space=smem, size = 0x200, scoped, tag = 'output window, operand 0, single buffered']
    #allocation4 [shape = 's32[1]{0}', space=sflag, size = 0x4, scoped, tag = 'scoped memory for _focal_bce_mean.1']
    %7 = vsyncpa [#allocation4], 0
    // Predicated region
    $region2: #{_focal_bce_mean.1} parent=1 // pred_check
      _
    $region3: #{_focal_bce_mean.1} parent=1 // pred_check_branch
      %9 = sbr.rel (0) target = $region5
    $region4: #{_focal_bce_mean.1} parent=1 // pred_region
      _
    $region5: #{_focal_bce_mean.1} parent=1 // pred_fallthru
      _
    // Predicated region
    $region6: #{_focal_bce_mean.1} parent=1 // pred_check
      _
    $region7: #{_focal_bce_mean.1} parent=1 // pred_check_branch
      %11 = sbr.rel (0) target = $region9
    $region8: #{_focal_bce_mean.1} parent=1 // pred_region
      _
    $region9: #{_focal_bce_mean.1} parent=1 // pred_fallthru
      _
    %p12 = scmp.eq.s32.totalorder 0, 0
    // Predicated region
    $region10: #{_focal_bce_mean.1} parent=1 // pred_check
      %p13 = pneg %p12
    $region11: #{_focal_bce_mean.1} parent=1 // pred_check_branch
      %15 = sbr.rel (%p13) target = $region13
    $region12: #{_focal_bce_mean.1} parent=1 // pred_region
      %16 = vst [vmem:[#allocation2] sm:$0x1] 0.0
    $region13: #{_focal_bce_mean.1} parent=1 // pred_fallthru
      _
    %v17 = vld [vmem:[%s0] sm:$0xff]
    %v18 = vld [vmem:[%s0 + $0x8] sm:$0xff]
    %v19 = vld [vmem:[%s1] sm:$0xff]
    %v20 = vld [vmem:[%s1 + $0x8] sm:$0xff]
    %v21 = vlog2.pop %v17
    %v22 = vmul.f32 %v21, 0.6931472
    %v23 = vlog2.pop %v18
    %v24 = vmul.f32 %v23, 0.6931472
    %v25 = vmax.f32 %v22, -100.0
    %v26 = vmax.f32 %v24, -100.0
    %v27 = vsub.f32 1.0, %v17
    %v28 = vsub.f32 1.0, %v18
    %v29 = vlog2.pop %v27
    %v30 = vmul.f32 %v29, 0.6931472
    %v31 = vlog2.pop %v28
    %v32 = vmul.f32 %v31, 0.6931472
    %v33 = vmax.f32 %v30, -100.0
    %v34 = vmax.f32 %v32, -100.0
    %v35 = vmul.f32 %v19, %v25
    %v36 = vmul.f32 %v20, %v26
    %v37 = vsub.f32 1.0, %v19
    %v38 = vsub.f32 1.0, %v20
    %v39 = vmul.f32 %v37, %v33
    %v40 = vmul.f32 %v38, %v34
    %v41 = vadd.f32 %v35, %v39
    %v42 = vadd.f32 %v36, %v40
    %v43 = vsub.f32 0.0, %v41
    %v44 = vsub.f32 0.0, %v42
    %v45 = vmul.f32 %v17, %v19
    %v46 = vmul.f32 %v18, %v20
    %v47 = vmul.f32 %v27, %v37
    %v48 = vmul.f32 %v28, %v38
    %v49 = vadd.f32 %v45, %v47
    %v50 = vadd.f32 %v46, %v48
    %v51 = vsub.f32 1.0, %v49
    %v52 = vsub.f32 1.0, %v50
    %v53 = vmul.f32 %v51, %v51
    %v54 = vmul.f32 %v52, %v52
    %v55 = vmul.f32 %v43, %v53
    %v56 = vmul.f32 %v44, %v54
    %v57 = vmul.f32 %v19, 0.25
    %v58 = vmul.f32 %v20, 0.25
    %v59 = vmul.f32 %v37, 0.75
    %v60 = vmul.f32 %v38, 0.75
    %v61 = vadd.f32 %v57, %v59
    %v62 = vadd.f32 %v58, %v60
    %v63 = vmul.f32 %v61, %v55
    %v64 = vmul.f32 %v62, %v56
    %v65 = vlaneseq
    %v66 = vshrl.u32 %v65, 7
    %v67 = vadd.s32 %v66, 8
    %v68 = vlaneseq
    %v69 = vand.u32 %v68, 127
    %s70 = smul.u32 0, 16
    %v71 = vstv %s70
    %v72 = vadd.s32 %v71, %v66
    %v73 = vadd.s32 %v71, %v67
    %v74 = vmul.u32 %v72, 128
    %v75 = vmul.u32 %v73, 128
    %v76 = vadd.s32 %v74, %v69
    %v77 = vadd.s32 %v75, %v69
    %vm78 = vcmp.lt.s32.totalorder %v76, 2000
    %vm79 = vcmp.lt.s32.totalorder %v77, 2000
    %v80 = vsel %vm78, %v63, 0.0
    %v81 = vsel %vm79, %v64, 0.0
    %v82 = vld [vmem:[#allocation2] sm:$0x1]
    %v83 = vadd.f32 %v80, %v81
    %v84 = vrot.slane %v83, 4
    %v85 = vadd.f32 %v83, %v84
    %v86 = vrot.slane %v85, 2
    %v87 = vadd.f32 %v85, %v86
    %v88 = vrot.slane %v87, 1
    %v89 = vadd.f32 %v87, %v88
    %v90 = vadd.f32 %v82, %v89
    %91 = vst [vmem:[#allocation2] sm:$0x1] %v90
    // Predicated region
    $region14: #{_focal_bce_mean.1} parent=1 // pred_check
      %p92 = pneg %p12
    $region15: #{_focal_bce_mean.1} parent=1 // pred_check_branch
      %94 = sbr.rel (%p92) target = $region17
    $region16: #{_focal_bce_mean.1} parent=1 // pred_region
      %v95 = vld [vmem:[#allocation2] sm:$0x1]
      %vm96 = vcmask 1040384
      %v97 = vsel %vm96, %v95, 0.0
      %98 = vadd.xlane.f32.xlu0 %v97
      %v99 = vpop.xlane.xlu0 %98
      %v100 = vrot.slane %v99, 4
      %v101 = vadd.f32 %v99, %v100
      %v102 = vrot.slane %v101, 2
      %v103 = vadd.f32 %v101, %v102
      %v104 = vrot.slane %v103, 1
      %v105 = vadd.f32 %v103, %v104
      %s106 = vtos %v105
      %v107 = vrcp.pop 2000.0
      %s108 = vtos %v107
      %s109 = smul.f32 %s106, %s108
      %s110 = scalar_lea.smem [#allocation3], 0
      %111 = sst [smem:[%s110]] %s109
    $region17: #{_focal_bce_mean.1} parent=1 // pred_fallthru
      _
    // Predicated region
    $region18: #{_focal_bce_mean.1} parent=1 // pred_check
      _
    $region19: #{_focal_bce_mean.1} parent=1 // pred_check_branch
      %113 = sbr.rel (0) target = $region21
    $region20: #{_focal_bce_mean.1} parent=1 // pred_region
      %s115 = ssub.s32 16, 16
      %116 = vsyncadd [#allocation4], %s115
      %119 = dma.smem_to_hbm [#allocation3], 16, %s2, [#allocation4]
    $region21: #{_focal_bce_mean.1} parent=1 // pred_fallthru
      _
    // Predicated region
    $region22: #{_focal_bce_mean.1} parent=1 // pred_check
      _
    $region23: #{_focal_bce_mean.1} parent=1 // pred_check_branch
      %121 = sbr.rel (0) target = $region25
    $region24: #{_focal_bce_mean.1} parent=1 // pred_region
      %122 = dma.done [#allocation4], 16
    $region25: #{_focal_bce_mean.1} parent=1 // pred_fallthru
      _
    %123 = sfence
    %124 = vsyncpa [#allocation4], 1

</llo_original>
